<compile_context>
chip_gen: v5e
topology: v5e:2x2
jax: 0.10.0
libtpu: 0.0.40
codegen_flags: <defaults>
</compile_context>

<pallas_src>
import jax
import jax.numpy as jnp
import numpy as np
from jax.experimental import pallas as pl
from jax.experimental.pallas import tpu as pltpu

_LANE = 128


def _round_up(x, m):
    return ((x + m - 1) // m) * m


# -----------------------------------------------------------------------------
# Kernel 1: projection  z = h @ W.T + b   (weight stored PyTorch-style (O, K))
# -----------------------------------------------------------------------------
def _proj_kernel(h_ref, w_ref, b_ref, o_ref):
    # h_ref: (TM, K)   node-feature tile
    # w_ref: (Dp, K)   lane-padded weight, VMEM-resident across the grid
    # b_ref: (1,  Dp)  lane-padded bias, VMEM-resident
    # o_ref: (TM, Dp)  lane-dense output tile
    acc = jax.lax.dot_general(
        h_ref[...], w_ref[...],
        dimension_numbers=(((1,), (1,)), ((), ())),  # contract K with K, no transpose
        preferred_element_type=jnp.float32)
    o_ref[...] = (acc + b_ref[...]).astype(o_ref.dtype)


def _pick_row_tile(n, k, dp, budget_bytes=24 * 1024 * 1024):
    # Size the node tile against a conservative VMEM budget so that the
    # double-buffered h/out tiles plus the resident weight fit within v7x's
    # 64 MiB physical / 32 MiB scoped default (also fine on v5e/v6e).
    per_row_bytes = 4 * 2 * (k + dp)  # double-buffered h row + out row, f32
    tm = (budget_bytes // per_row_bytes) // 8 * 8
    tm = max(8, min(1024, tm))
    return n if n <= tm else tm


def project_nodes(h, weight, bias):
    """z_pad = h @ weight.T + bias, output dim zero-padded to a multiple of 128."""
    n, k = h.shape
    out_dim = weight.shape[0]
    dp = max(_LANE, _round_up(out_dim, _LANE))

    w_pad = jnp.zeros((dp, k), jnp.float32).at[:out_dim].set(weight.astype(jnp.float32))
    b_pad = jnp.zeros((1, dp), jnp.float32).at[0, :out_dim].set(bias.astype(jnp.float32))
    h = h.astype(jnp.float32)

    tm = _pick_row_tile(n, k, dp)
    grid = (pl.cdiv(n, tm),)

    cost = pl.CostEstimate(
        flops=2 * n * k * dp,
        transcendentals=0,
        bytes_accessed=4 * (n * k + dp * k + dp + n * dp))

    return pl.pallas_call(
        _proj_kernel,
        out_shape=jax.ShapeDtypeStruct((n, dp), jnp.float32),
        grid_spec=pl.GridSpec(
            grid=grid,
            in_specs=[
                pl.BlockSpec((tm, k), lambda i: (i, 0)),   # tiled over nodes
                pl.BlockSpec((dp, k), lambda i: (0, 0)),   # weight stays resident
                pl.BlockSpec((1, dp), lambda i: (0, 0)),   # bias stays resident
            ],
            out_specs=pl.BlockSpec((tm, dp), lambda i: (i, 0)),
        ),
        compiler_params=pltpu.CompilerParams(
            dimension_semantics=("parallel",),             # shard rows across TCs (v7x)
            vmem_limit_bytes=32 * 1024 * 1024),
        cost_estimate=cost,
    )(h, w_pad, b_pad)


# -----------------------------------------------------------------------------
# Kernel 2: per-edge scores  (z[src] * z[dst]).sum(-1)
# -----------------------------------------------------------------------------
def _edge_score_kernel(z_ref, src_ref, dst_ref, o_ref):
    # z_ref:  (N, Dp)  projected nodes, VMEM-resident (padded cols are zero)
    # src_ref/dst_ref: (TE, 1) int32 edge endpoints for this block
    # o_ref:  (TE, 1)  per-edge scores
    n = z_ref.shape[0]
    te = src_ref.shape[0]
    z = z_ref[...]
    node_ids = jax.lax.broadcasted_iota(jnp.int32, (te, n), 1)
    onehot_src = (node_ids == src_ref[...]).astype(jnp.float32)
    onehot_dst = (node_ids == dst_ref[...]).astype(jnp.float32)
    z_src = jnp.dot(onehot_src, z, preferred_element_type=jnp.float32)  # gather on MXU
    z_dst = jnp.dot(onehot_dst, z, preferred_element_type=jnp.float32)
    o_ref[...] = jnp.sum(z_src * z_dst, axis=-1, keepdims=True)


def edge_scores(z_pad, edge_index):
    """(z[src] * z[dst]).sum(-1) for every edge column of edge_index (2, E)."""
    # TODO(synk): for very large N, replace the resident-z one-hot gather with a
    # manual DMA row gather (memory_space=pl.ANY + pltpu.make_async_copy).
    n, dp = z_pad.shape
    e = edge_index.shape[1]
    te = min(256, _round_up(e, 8))
    e_pad = _round_up(e, te)

    src = jnp.zeros((e_pad, 1), jnp.int32).at[:e, 0].set(edge_index[0].astype(jnp.int32))
    dst = jnp.zeros((e_pad, 1), jnp.int32).at[:e, 0].set(edge_index[1].astype(jnp.int32))

    scores = pl.pallas_call(
        _edge_score_kernel,
        out_shape=jax.ShapeDtypeStruct((e_pad, 1), jnp.float32),
        grid_spec=pl.GridSpec(
            grid=(e_pad // te,),
            in_specs=[
                pl.BlockSpec((n, dp), lambda i: (0, 0)),   # z resident in VMEM
                pl.BlockSpec((te, 1), lambda i: (i, 0)),
                pl.BlockSpec((te, 1), lambda i: (i, 0)),
            ],
            out_specs=pl.BlockSpec((te, 1), lambda i: (i, 0)),
        ),
        compiler_params=pltpu.CompilerParams(
            dimension_semantics=("parallel",),
            vmem_limit_bytes=32 * 1024 * 1024),
    )(z_pad, src, dst)
    return scores[:e, 0]


def link_predictor_forward(h, weight, bias, pos_edge_index, neg_edge_index):
    """Pallas equivalent of LinkPredictor.forward -> (pos_scores, neg_scores)."""
    z_pad = project_nodes(h, weight, bias)  # project once; padded cols are exactly 0
    e_pos = pos_edge_index.shape[1]
    edges = jnp.concatenate([pos_edge_index.astype(jnp.int32),
                             neg_edge_index.astype(jnp.int32)], axis=1)
    scores = edge_scores(z_pad, edges)      # single launch for pos + neg edges
    return scores[:e_pos], scores[e_pos:]


if __name__ == "__main__":
    # Small shapes consistent with the module.
    N, hidden_dim, output_dim = 16, 32, 8
    E_pos, E_neg = 8, 8

    key = jax.random.PRNGKey(0)
    k_h, k_w, k_b, k_pe, k_ne = jax.random.split(key, 5)

    h = jax.random.normal(k_h, (N, hidden_dim), dtype=jnp.float32)
    bound = 1.0 / float(np.sqrt(hidden_dim))
    weight = jax.random.uniform(k_w, (output_dim, hidden_dim),
                                minval=-bound, maxval=bound, dtype=jnp.float32)
    bias = jax.random.uniform(k_b, (output_dim,),
                              minval=-bound, maxval=bound, dtype=jnp.float32)
    pos_edge_index = jax.random.randint(k_pe, (2, E_pos), 0, N, dtype=jnp.int32)
    neg_edge_index = jax.random.randint(k_ne, (2, E_neg), 0, N, dtype=jnp.int32)

    pos_scores, neg_scores = link_predictor_forward(
        h, weight, bias, pos_edge_index, neg_edge_index)
    jax.block_until_ready((pos_scores, neg_scores))

    # Host-side f32 reference with torch.nn.Linear semantics.
    h_np, w_np, b_np = np.asarray(h), np.asarray(weight), np.asarray(bias)
    z_np = h_np @ w_np.T + b_np
    pe, ne = np.asarray(pos_edge_index), np.asarray(neg_edge_index)
    pos_ref = (z_np[pe[0]] * z_np[pe[1]]).sum(-1)
    neg_ref = (z_np[ne[0]] * z_np[ne[1]]).sum(-1)

    assert pos_scores.shape == (E_pos,) and neg_scores.shape == (E_neg,)
    np.testing.assert_allclose(np.asarray(pos_scores), pos_ref, atol=1e-4, rtol=1e-4)
    np.testing.assert_allclose(np.asarray(neg_scores), neg_ref, atol=1e-4, rtol=1e-4)

    print("KERNEL_OK")
</pallas_src>

<mosaic_0001>
module attributes {stable_mosaic.version = 11 : i64} {
  func.func @_proj_kernel(%arg0: i32, %arg1: memref<16x32xf32, #tpu.memory_space<vmem>>, %arg2: memref<128x32xf32, #tpu.memory_space<vmem>>, %arg3: memref<1x128xf32, #tpu.memory_space<vmem>>, %arg4: memref<16x128xf32, #tpu.memory_space<vmem>>) attributes {dimension_semantics = [#tpu.dimension_semantics<parallel>], iteration_bounds = array<i64: 1>, scalar_prefetch = 0 : i64, scratch_operands = 0 : i64, tpu.core_type = #tpu.core_type<tc>, window_params = [{transform_indices = @transform_0, window_bounds = array<i64: 16, 32>}, {pipeline_mode = #tpu.pipeline_mode<synchronous>, transform_indices = @transform_1, window_bounds = array<i64: 128, 32>}, {pipeline_mode = #tpu.pipeline_mode<synchronous>, transform_indices = @transform_2, window_bounds = array<i64: 1, 128>}, {transform_indices = @transform_3, window_bounds = array<i64: 16, 128>}]} {
    %c0 = arith.constant 0 : index
    %c0_0 = arith.constant 0 : index
    %0 = vector.load %arg1[%c0, %c0_0] : memref<16x32xf32, #tpu.memory_space<vmem>>, vector<16x32xf32>
    %c0_1 = arith.constant 0 : index
    %c0_2 = arith.constant 0 : index
    %1 = vector.load %arg2[%c0_1, %c0_2] : memref<128x32xf32, #tpu.memory_space<vmem>>, vector<128x32xf32>
    %cst = arith.constant dense<0.000000e+00> : vector<16x128xf32>
    %2 = tpu.matmul %0, %1, %cst {dimension_numbers = #tpu.dot_dimension_numbers<[1], [1], [0], [0], [0, 0, 1, 0], [], []>} : vector<16x32xf32>, vector<128x32xf32>, vector<16x128xf32> -> vector<16x128xf32>
    %c0_3 = arith.constant 0 : index
    %c0_4 = arith.constant 0 : index
    %3 = vector.load %arg3[%c0_3, %c0_4] : memref<1x128xf32, #tpu.memory_space<vmem>>, vector<1x128xf32>
    %4 = vector.broadcast %3 : vector<1x128xf32> to vector<16x128xf32>
    %5 = arith.addf %2, %4 : vector<16x128xf32>
    %c0_5 = arith.constant 0 : index
    %c0_6 = arith.constant 0 : index
    %6 = vector.load %arg4[%c0_5, %c0_6] : memref<16x128xf32, #tpu.memory_space<vmem>>, vector<16x128xf32>
    tpu.vector_store %arg4[%c0_5, %c0_6], %5 {strides = array<i32>} : memref<16x128xf32, #tpu.memory_space<vmem>>, vector<16x128xf32>,
    return
  }
  func.func @transform_0(%arg0: i32) -> (i32, i32) {
    %c0_i32 = arith.constant 0 : i32
    %c0_i32_0 = arith.constant 0 : i32
    return %arg0, %c0_i32 : i32, i32
  }
  func.func @transform_1(%arg0: i32) -> (i32, i32) {
    %c0_i32 = arith.constant 0 : i32
    %c0_i32_0 = arith.constant 0 : i32
    %c0_i32_1 = arith.constant 0 : i32
    return %c0_i32, %c0_i32_0 : i32, i32
  }
  func.func @transform_2(%arg0: i32) -> (i32, i32) {
    %c0_i32 = arith.constant 0 : i32
    %c0_i32_0 = arith.constant 0 : i32
    %c0_i32_1 = arith.constant 0 : i32
    return %c0_i32, %c0_i32_0 : i32, i32
  }
  func.func @transform_3(%arg0: i32) -> (i32, i32) {
    %c0_i32 = arith.constant 0 : i32
    %c0_i32_0 = arith.constant 0 : i32
    return %arg0, %c0_i32 : i32, i32
  }
}

</mosaic_0001>

<llo_original>
// kernel: tpu_custom_call.1
$region0: #{tpu_custom_call.1}
  #allocation0 [shape = 'u32[]', space=smem, size = 0x4, offset = 0x4, fixed_abs, tag = 'smem constant byte address 0x4 - core index']
  #allocation1 [shape = 'u32[72,128]{1,0:T(1,128)}', space=vmem, size = 0x9000, scoped, tag = 'internal scratch']
  %s0 = inlined_call_operand.vmem [shape: f32[16,32], index: 0, kind: input, shape index: {}]
  %s1 = inlined_call_operand.vmem [shape: f32[128,32], index: 1, kind: input, shape index: {}]
  %s2 = inlined_call_operand.vmem [shape: f32[1,128], index: 2, kind: input, shape index: {}]
  %s3 = inlined_call_operand.hbm [shape: f32[16,128], index: 3, kind: output, shape index: {}]
  %s4 = sld [smem:[#allocation0]]
  $region22: #{tpu_custom_call.1} parent=0
    _
  %s6 = ssub.s32 1, %s4
  %s7 = scalar_select 0, %s6, %s4
  $region1: #{tpu_custom_call.1} parent=0
    #allocation2 [shape = 'u8[8192]{0}', space=vmem, size = 0x2000, scoped, tag = 'output window, operand 0, single buffered']
    #allocation3 [shape = 's32[1]{0}', space=sflag, size = 0x4, scoped, tag = 'scoped memory for tpu_custom_call.1']
    %8 = vsyncpa [#allocation3], 0
    // Predicated region
    $region2: #{tpu_custom_call.1} parent=1 // pred_check
      _
    $region3: #{tpu_custom_call.1} parent=1 // pred_check_branch
      %10 = sbr.rel (0) target = $region5
    $region4: #{tpu_custom_call.1} parent=1 // pred_region
      _
    $region5: #{tpu_custom_call.1} parent=1 // pred_fallthru
      _
    // Predicated region
    $region6: #{tpu_custom_call.1} parent=1 // pred_check
      _
    $region7: #{tpu_custom_call.1} parent=1 // pred_check_branch
      %12 = sbr.rel (0) target = $region9
    $region8: #{tpu_custom_call.1} parent=1 // pred_region
      _
    $region9: #{tpu_custom_call.1} parent=1 // pred_fallthru
      _
    // Predicated region
    $region10: #{tpu_custom_call.1} parent=1 // pred_check
      _
    $region11: #{tpu_custom_call.1} parent=1 // pred_check_branch
      %14 = sbr.rel (0) target = $region13
    $region12: #{tpu_custom_call.1} parent=1 // pred_region
      _
    $region13: #{tpu_custom_call.1} parent=1 // pred_fallthru
      _
    %v15 = vld [vmem:[%s0] sm:$0xff]
    %v16 = vld [vmem:[%s0 + $0x8] sm:$0xff]
    %v17 = vld [vmem:[%s1] sm:$0xff]
    %v18 = vld [vmem:[%s1 + $0x8] sm:$0xff]
    %v19 = vld [vmem:[%s1 + $0x10] sm:$0xff]
    %v20 = vld [vmem:[%s1 + $0x18] sm:$0xff]
    %v21 = vld [vmem:[%s1 + $0x20] sm:$0xff]
    %v22 = vld [vmem:[%s1 + $0x28] sm:$0xff]
    %v23 = vld [vmem:[%s1 + $0x30] sm:$0xff]
    %v24 = vld [vmem:[%s1 + $0x38] sm:$0xff]
    %v25 = vld [vmem:[%s1 + $0x40] sm:$0xff]
    %v26 = vld [vmem:[%s1 + $0x48] sm:$0xff]
    %v27 = vld [vmem:[%s1 + $0x50] sm:$0xff]
    %v28 = vld [vmem:[%s1 + $0x58] sm:$0xff]
    %v29 = vld [vmem:[%s1 + $0x60] sm:$0xff]
    %v30 = vld [vmem:[%s1 + $0x68] sm:$0xff]
    %v31 = vld [vmem:[%s1 + $0x70] sm:$0xff]
    %v32 = vld [vmem:[%s1 + $0x78] sm:$0xff]
    %v33 = vld [vmem:[%s2] sm:$0x1]
    %v35 = vperm.slane %v33, 0
    %vm37 = vcmask 261120
    %v39 = vsel %vm37, %v15, 0
    %v42 = vsel %vm37, %v16, 0
    %v45 = vsel %vm37, %v17, 0
    %v48 = vsel %vm37, %v18, 0
    %v51 = vsel %vm37, %v19, 0
    %v54 = vsel %vm37, %v20, 0
    %v57 = vsel %vm37, %v21, 0
    %v60 = vsel %vm37, %v22, 0
    %v63 = vsel %vm37, %v23, 0
    %v66 = vsel %vm37, %v24, 0
    %v69 = vsel %vm37, %v25, 0
    %v72 = vsel %vm37, %v26, 0
    %v75 = vsel %vm37, %v27, 0
    %v78 = vsel %vm37, %v28, 0
    %v81 = vsel %vm37, %v29, 0
    %v84 = vsel %vm37, %v30, 0
    %v87 = vsel %vm37, %v31, 0
    %v90 = vsel %vm37, %v32, 0
    %92 = vmatpush.xpose.msra.mxu0 %v90
    %93 = vmatpush.xpose.msra.mxu0 %v87
    %94 = vmatpush.xpose.msra.mxu0 %v84
    %95 = vmatpush.xpose.msra.mxu0 %v81
    %96 = vmatpush.xpose.msra.mxu0 %v78
    %97 = vmatpush.xpose.msra.mxu0 %v75
    %98 = vmatpush.xpose.msra.mxu0 %v72
    %99 = vmatpush.xpose.msra.mxu0 %v69
    %100 = vmatpush.xpose.msra.mxu0 %v66
    %101 = vmatpush.xpose.msra.mxu0 %v63
    %102 = vmatpush.xpose.msra.mxu0 %v60
    %103 = vmatpush.xpose.msra.mxu0 %v57
    %104 = vmatpush.xpose.msra.mxu0 %v54
    %105 = vmatpush.xpose.msra.mxu0 %v51
    %106 = vmatpush.xpose.msra.mxu0 %v48
    %107 = vmatpush.xpose.msra.mxu0 %v45
    %108 = vmatmul.f32.gmra.mxu0 %v39
    %v109 = vpop.f32.mrf.mxu0
    %v110 = vadd.f32 %v35, %v109
    %111 = vmatmul.f32.gmra.mxu0 %v42
    %v112 = vpop.f32.mrf.mxu0
    %v113 = vadd.f32 %v35, %v112
    %114 = vdwg.mxu0
    %115 = vst [vmem:[#allocation2] sm:$0xff] %v110
    %116 = vst [vmem:[#allocation2 + $0x8] sm:$0xff] %v113
    // Predicated region
    $region14: #{tpu_custom_call.1} parent=1 // pred_check
      _
    $region15: #{tpu_custom_call.1} parent=1 // pred_check_branch
      %118 = sbr.rel (0) target = $region17
    $region16: #{tpu_custom_call.1} parent=1 // pred_region
      %120 = vsyncadd [#allocation3], 0
      %s121 = sshll.u32 [#allocation2], 4
      %s122 = int_to_ptr.vmem [resolvable:$true] %s121
      %s123 = sshll.u32 %s3, 4
      %s124 = int_to_ptr.hbm [resolvable:$true] %s123
      %129 = dma.vmem_to_hbm [thread:$0]  %s122, 256, %s124, [#allocation3], 128, 128, 8
    $region17: #{tpu_custom_call.1} parent=1 // pred_fallthru
      _
    // Predicated region
    $region18: #{tpu_custom_call.1} parent=1 // pred_check
      _
    $region19: #{tpu_custom_call.1} parent=1 // pred_check_branch
      %131 = sbr.rel (0) target = $region21
    $region20: #{tpu_custom_call.1} parent=1 // pred_region
      %133 = dma.done [#allocation3], 256
    $region21: #{tpu_custom_call.1} parent=1 // pred_fallthru
      _
    %134 = vsyncpa [#allocation3], 1

</llo_original>
